<compile_context>
chip_gen: v7x
topology: tpu7x:2x2x1
jax: 0.10.0
libtpu: 0.0.40
codegen_flags: <defaults>
</compile_context>

<pallas_src>
import functools
import math

import jax
import jax.numpy as jnp
from jax import lax
from jax.experimental import pallas as pl
from jax.experimental.pallas import tpu as pltpu


# ----------------------------- Pallas kernel ------------------------------

def _selector_logits_kernel(x_ref, w_ref, b_ref, o_ref):
    # x_ref: (TILE_N, D), w_ref: (C_pad, D), b_ref: (1, C_pad),
    # o_ref: (TILE_N, C_pad)
    # Contract dim 1 of x with dim 1 of w -> (TILE_N, C_pad). No materialized
    # transpose of the weight tile; MXU is fed directly with f32 accumulation.
    logits = lax.dot_general(
        x_ref[...], w_ref[...],
        dimension_numbers=(((1,), (1,)), ((), ())),
        preferred_element_type=jnp.float32,
    )
    o_ref[...] = (logits + b_ref[...]).astype(o_ref.dtype)


# ------------------------------- Wrapper -----------------------------------

def _round_up(v, m):
    return (v + m - 1) // m * m


def _cdiv(a, b):
    return (a + b - 1) // b


def _pick_row_tile(n, tile_n):
    """Row tile: multiple of 8 sublanes, <= padded N, default 512 rows."""
    n8 = _round_up(max(n, 1), 8)
    t = _round_up(min(tile_n, n8), 8)
    # v7x megacore: prefer >=2 "parallel" grid steps when N is large enough
    # that halving the tile still amortizes the ~0.35us per-step overhead.
    if _cdiv(n8, t) < 2 and n8 >= 512:
        t = _round_up(_cdiv(n8, 2), 8)
    return t


@functools.partial(jax.jit, static_argnames=("tile_n",))
def selector_get_logits(x, rel_weight, bias, tile_n=512):
    """logits = x @ rel_weight.T + bias via a single N-gridded Pallas call.

    Only the class dim C is zero-padded (to 128, for lane-dense output
    stores); the contraction dim D is left unpadded and the block shapes use
    the full D extent. Zero padding contributes nothing to the dot and the
    padded columns are sliced off, so the (N, C) result is exact.
    """
    n, d = x.shape
    c, d2 = rel_weight.shape
    assert d == d2

    c_pad = _round_up(c, 128)
    t_n = _pick_row_tile(n, tile_n)
    n_pad = _round_up(n, t_n)

    x_p = x if n_pad == n else jnp.pad(x, ((0, n_pad - n), (0, 0)))
    w_p = rel_weight if c_pad == c else jnp.pad(rel_weight, ((0, c_pad - c), (0, 0)))
    b_p = jnp.pad(bias, (0, c_pad - c)).reshape(1, c_pad)

    itemsize = jnp.dtype(x.dtype).itemsize
    cost = pl.CostEstimate(  # true (unpadded) work, advisory only
        flops=2 * n * d * c,
        transcendentals=0,
        bytes_accessed=itemsize * (n * d + c * d + c + n * c),
    )

    out = pl.pallas_call(
        _selector_logits_kernel,
        out_shape=jax.ShapeDtypeStruct((n_pad, c_pad), x.dtype),
        grid=(n_pad // t_n,),
        in_specs=[
            # x tile moves with the grid; last dim = full D (no HBM padding).
            pl.BlockSpec((t_n, d), lambda i: (i, 0)),
            # Weight / bias are pinned (constant index_map) -> single buffer.
            pl.BlockSpec((c_pad, d), lambda i: (0, 0),
                         pipeline_mode=pl.Buffered(1)),
            pl.BlockSpec((1, c_pad), lambda i: (0, 0),
                         pipeline_mode=pl.Buffered(1)),
        ],
        out_specs=pl.BlockSpec((t_n, c_pad), lambda i: (i, 0)),
        compiler_params=pltpu.CompilerParams(
            dimension_semantics=("parallel",)),  # v7x: shard N over both TCs
        cost_estimate=cost,
    )(x_p, w_p, b_p)

    # Slice back to the true shape; fused into the same jit-compiled program.
    return out[:n, :c]


# ------------------------- Parameter construction -------------------------

class Config:
    flat_num_classes = 16
    global_num_classes = 8
    base_model_drop_prob = 0.5


def xavier_uniform(key, shape, dtype=jnp.float32):
    # PyTorch xavier_uniform_ on a 2D tensor: fan_out = shape[0], fan_in = shape[1]
    fan_out, fan_in = shape
    bound = math.sqrt(6.0 / (fan_in + fan_out))
    return jax.random.uniform(key, shape, dtype, minval=-bound, maxval=bound)


def init_selector_params(key, config, relation_dim):
    k1, k2, k3, k4 = jax.random.split(key, 4)
    params = {
        # nn.Embedding(flat_num_classes, relation_dim) -> weight (C_flat, D)
        "relation_matrix": xavier_uniform(k1, (config.flat_num_classes, relation_dim)),
        # nn.Parameter(torch.Tensor(flat_num_classes)), init.normal_
        "bias": jax.random.normal(k2, (config.flat_num_classes,), jnp.float32),
        # attention embeddings exist in __init__ but are not used by get_logits
        "attention_matrix": xavier_uniform(k3, (config.global_num_classes, relation_dim)),
        "attention_matrix_flat": xavier_uniform(k4, (config.flat_num_classes, relation_dim)),
    }
    return params


# ---------------------------------- Main -----------------------------------

if __name__ == "__main__":
    config = Config()
    relation_dim = 32
    batch = 8  # number of sentence representations / bag vectors

    key = jax.random.PRNGKey(0)
    kp, kx = jax.random.split(key)
    params = init_selector_params(kp, config, relation_dim)

    x = jax.random.normal(kx, (batch, relation_dim), jnp.float32)

    logits = selector_get_logits(x, params["relation_matrix"], params["bias"])
    logits = jax.block_until_ready(logits)

    # Reference check (plain JAX, mirrors torch.matmul(x, W.T) + bias)
    ref = x @ params["relation_matrix"].T + params["bias"]
    assert logits.shape == (batch, config.flat_num_classes)
    assert jnp.allclose(logits, ref, atol=1e-5, rtol=1e-5)

    # TODO(synk): forward()/test() raise NotImplementedError in the source
    # module; dropout and the attention embeddings have no defined use here.

    print("KERNEL_OK")
</pallas_src>

<mosaic_0001>
module attributes {stable_mosaic.version = 11 : i64} {
  func.func @_selector_logits_kernel(%arg0: i32, %arg1: memref<8x32xf32, #tpu.memory_space<vmem>>, %arg2: memref<128x32xf32, #tpu.memory_space<vmem>>, %arg3: memref<1x128xf32, #tpu.memory_space<vmem>>, %arg4: memref<8x128xf32, #tpu.memory_space<vmem>>) attributes {dimension_semantics = [#tpu.dimension_semantics<parallel>], iteration_bounds = array<i64: 1>, scalar_prefetch = 0 : i64, scratch_operands = 0 : i64, tpu.core_type = #tpu.core_type<tc>, window_params = [{transform_indices = @transform_0, window_bounds = array<i64: 8, 32>}, {pipeline_mode = #tpu.pipeline_mode<synchronous>, transform_indices = @transform_1, window_bounds = array<i64: 128, 32>}, {pipeline_mode = #tpu.pipeline_mode<synchronous>, transform_indices = @transform_2, window_bounds = array<i64: 1, 128>}, {transform_indices = @transform_3, window_bounds = array<i64: 8, 128>}]} {
    %c0 = arith.constant 0 : index
    %c0_0 = arith.constant 0 : index
    %0 = vector.load %arg1[%c0, %c0_0] : memref<8x32xf32, #tpu.memory_space<vmem>>, vector<8x32xf32>
    %c0_1 = arith.constant 0 : index
    %c0_2 = arith.constant 0 : index
    %1 = vector.load %arg2[%c0_1, %c0_2] : memref<128x32xf32, #tpu.memory_space<vmem>>, vector<128x32xf32>
    %cst = arith.constant dense<0.000000e+00> : vector<8x128xf32>
    %2 = tpu.matmul %0, %1, %cst {dimension_numbers = #tpu.dot_dimension_numbers<[1], [1], [0], [0], [0, 0, 1, 0], [], []>} : vector<8x32xf32>, vector<128x32xf32>, vector<8x128xf32> -> vector<8x128xf32>
    %c0_3 = arith.constant 0 : index
    %c0_4 = arith.constant 0 : index
    %3 = vector.load %arg3[%c0_3, %c0_4] : memref<1x128xf32, #tpu.memory_space<vmem>>, vector<1x128xf32>
    %4 = vector.broadcast %3 : vector<1x128xf32> to vector<8x128xf32>
    %5 = arith.addf %2, %4 : vector<8x128xf32>
    %c0_5 = arith.constant 0 : index
    %c0_6 = arith.constant 0 : index
    %6 = vector.load %arg4[%c0_5, %c0_6] : memref<8x128xf32, #tpu.memory_space<vmem>>, vector<8x128xf32>
    tpu.vector_store %arg4[%c0_5, %c0_6], %5 {strides = array<i32>} : memref<8x128xf32, #tpu.memory_space<vmem>>, vector<8x128xf32>,
    return
  }
  func.func @transform_0(%arg0: i32) -> (i32, i32) {
    %c0_i32 = arith.constant 0 : i32
    %c0_i32_0 = arith.constant 0 : i32
    return %arg0, %c0_i32 : i32, i32
  }
  func.func @transform_1(%arg0: i32) -> (i32, i32) {
    %c0_i32 = arith.constant 0 : i32
    %c0_i32_0 = arith.constant 0 : i32
    %c0_i32_1 = arith.constant 0 : i32
    return %c0_i32, %c0_i32_0 : i32, i32
  }
  func.func @transform_2(%arg0: i32) -> (i32, i32) {
    %c0_i32 = arith.constant 0 : i32
    %c0_i32_0 = arith.constant 0 : i32
    %c0_i32_1 = arith.constant 0 : i32
    return %c0_i32, %c0_i32_0 : i32, i32
  }
  func.func @transform_3(%arg0: i32) -> (i32, i32) {
    %c0_i32 = arith.constant 0 : i32
    %c0_i32_0 = arith.constant 0 : i32
    return %arg0, %c0_i32 : i32, i32
  }
}

</mosaic_0001>

<llo_original>
// kernel: selector_get_logits.1
$region0: #{selector_get_logits.1}
  #allocation0 [shape = 'u32[]', space=smem, size = 0x4, offset = 0x4, fixed_abs, tag = 'smem constant byte address 0x4 - core index']
  #allocation1 [shape = 'u32[144,128]{1,0:T(1,128)}', space=vmem, size = 0x12000, scoped, tag = 'internal scratch']
  %s0 = inlined_call_operand.vmem [shape: f32[8,32], index: 0, kind: input, shape index: {}]
  %s1 = inlined_call_operand.vmem [shape: f32[128,32], index: 1, kind: input, shape index: {}]
  %s2 = inlined_call_operand.vmem [shape: f32[1,128], index: 2, kind: input, shape index: {}]
  %s3 = inlined_call_operand.hbm [shape: f32[8,128], index: 3, kind: output, shape index: {}]
  %s4 = sld [smem:[#allocation0]]
  $region22: #{selector_get_logits.1} parent=0
    _
  %s6 = ssub.s32 1, %s4
  %s7 = scalar_select 0, %s6, %s4
  $region1: #{selector_get_logits.1} parent=0
    #allocation2 [shape = 'u8[4096]{0}', space=vmem, size = 0x1000, scoped, tag = 'output window, operand 0, single buffered']
    #allocation3 [shape = 's32[1]{0}', space=sflag, size = 0x4, scoped, tag = 'scoped memory for selector_get_logits.1']
    %8 = vsyncpa [#allocation3], 0
    // Predicated region
    $region2: #{selector_get_logits.1} parent=1 // pred_check
      _
    $region3: #{selector_get_logits.1} parent=1 // pred_check_branch
      %10 = sbr.rel (0) target = $region5
    $region4: #{selector_get_logits.1} parent=1 // pred_region
      _
    $region5: #{selector_get_logits.1} parent=1 // pred_fallthru
      _
    // Predicated region
    $region6: #{selector_get_logits.1} parent=1 // pred_check
      _
    $region7: #{selector_get_logits.1} parent=1 // pred_check_branch
      %12 = sbr.rel (0) target = $region9
    $region8: #{selector_get_logits.1} parent=1 // pred_region
      _
    $region9: #{selector_get_logits.1} parent=1 // pred_fallthru
      _
    // Predicated region
    $region10: #{selector_get_logits.1} parent=1 // pred_check
      _
    $region11: #{selector_get_logits.1} parent=1 // pred_check_branch
      %14 = sbr.rel (0) target = $region13
    $region12: #{selector_get_logits.1} parent=1 // pred_region
      _
    $region13: #{selector_get_logits.1} parent=1 // pred_fallthru
      _
    %v15 = vld [vmem:[%s0] sm:$0xff]
    %v16 = vld [vmem:[%s1] sm:$0xff]
    %v17 = vld [vmem:[%s1 + $0x8] sm:$0xff]
    %v18 = vld [vmem:[%s1 + $0x10] sm:$0xff]
    %v19 = vld [vmem:[%s1 + $0x18] sm:$0xff]
    %v20 = vld [vmem:[%s1 + $0x20] sm:$0xff]
    %v21 = vld [vmem:[%s1 + $0x28] sm:$0xff]
    %v22 = vld [vmem:[%s1 + $0x30] sm:$0xff]
    %v23 = vld [vmem:[%s1 + $0x38] sm:$0xff]
    %v24 = vld [vmem:[%s1 + $0x40] sm:$0xff]
    %v25 = vld [vmem:[%s1 + $0x48] sm:$0xff]
    %v26 = vld [vmem:[%s1 + $0x50] sm:$0xff]
    %v27 = vld [vmem:[%s1 + $0x58] sm:$0xff]
    %v28 = vld [vmem:[%s1 + $0x60] sm:$0xff]
    %v29 = vld [vmem:[%s1 + $0x68] sm:$0xff]
    %v30 = vld [vmem:[%s1 + $0x70] sm:$0xff]
    %v31 = vld [vmem:[%s1 + $0x78] sm:$0xff]
    %v32 = vld [vmem:[%s2] sm:$0x1]
    %v34 = vlaneseq
    %v35 = vshrl.u32 %v34, 7
    %v36 = vsub.s32 0, %v35
    %v37 = vrot.slane %v32, %v36
    %vm39 = vcmask 261120
    %v41 = vsel %vm39, %v15, 0
    %v44 = vsel %vm39, %v16, 0
    %v47 = vsel %vm39, %v17, 0
    %v50 = vsel %vm39, %v18, 0
    %v53 = vsel %vm39, %v19, 0
    %v56 = vsel %vm39, %v20, 0
    %v59 = vsel %vm39, %v21, 0
    %v62 = vsel %vm39, %v22, 0
    %v65 = vsel %vm39, %v23, 0
    %v68 = vsel %vm39, %v24, 0
    %v71 = vsel %vm39, %v25, 0
    %v74 = vsel %vm39, %v26, 0
    %v77 = vsel %vm39, %v27, 0
    %v80 = vsel %vm39, %v28, 0
    %v83 = vsel %vm39, %v29, 0
    %v86 = vsel %vm39, %v30, 0
    %v89 = vsel %vm39, %v31, 0
    %91 = vmatprep.subr.mxu0 0.0
    %92 = vmatpush1.xpose.msra.mxu0 %v44
    %93 = vmatprep.subr.mxu0 0.0
    %94 = vmatpush1.xpose.msra.mxu0 %v47
    %95 = vmatprep.subr.mxu0 0.0
    %96 = vmatpush1.xpose.msra.mxu0 %v50
    %97 = vmatprep.subr.mxu0 0.0
    %98 = vmatpush1.xpose.msra.mxu0 %v53
    %99 = vmatprep.subr.mxu0 0.0
    %100 = vmatpush1.xpose.msra.mxu0 %v56
    %101 = vmatprep.subr.mxu0 0.0
    %102 = vmatpush1.xpose.msra.mxu0 %v59
    %103 = vmatprep.subr.mxu0 0.0
    %104 = vmatpush1.xpose.msra.mxu0 %v62
    %105 = vmatprep.subr.mxu0 0.0
    %106 = vmatpush1.xpose.msra.mxu0 %v65
    %107 = vmatprep.subr.mxu0 0.0
    %108 = vmatpush1.xpose.msra.mxu0 %v68
    %109 = vmatprep.subr.mxu0 0.0
    %110 = vmatpush1.xpose.msra.mxu0 %v71
    %111 = vmatprep.subr.mxu0 0.0
    %112 = vmatpush1.xpose.msra.mxu0 %v74
    %113 = vmatprep.subr.mxu0 0.0
    %114 = vmatpush1.xpose.msra.mxu0 %v77
    %115 = vmatprep.subr.mxu0 0.0
    %116 = vmatpush1.xpose.msra.mxu0 %v80
    %117 = vmatprep.subr.mxu0 0.0
    %118 = vmatpush1.xpose.msra.mxu0 %v83
    %119 = vmatprep.subr.mxu0 0.0
    %120 = vmatpush1.xpose.msra.mxu0 %v86
    %121 = vmatprep.subr.mxu0 0.0
    %122 = vmatpush1.xpose.msra.mxu0 %v89
    %123 = vmatprep.subr.mxu0 0.0
    %124 = vmatpush1.xpose.msra.mxu0 0.0
    %125 = vmatprep.subr.mxu0 0.0
    %126 = vmatpush1.xpose.msra.mxu0 0.0
    %127 = vmatprep.subr.mxu0 0.0
    %128 = vmatpush1.xpose.msra.mxu0 0.0
    %129 = vmatprep.subr.mxu0 0.0
    %130 = vmatpush1.xpose.msra.mxu0 0.0
    %131 = vmatprep.subr.mxu0 0.0
    %132 = vmatpush1.xpose.msra.mxu0 0.0
    %133 = vmatprep.subr.mxu0 0.0
    %134 = vmatpush1.xpose.msra.mxu0 0.0
    %135 = vmatprep.subr.mxu0 0.0
    %136 = vmatpush1.xpose.msra.mxu0 0.0
    %137 = vmatprep.subr.mxu0 0.0
    %138 = vmatpush1.xpose.msra.mxu0 0.0
    %139 = vmatprep.subr.mxu0 0.0
    %140 = vmatpush1.xpose.msra.mxu0 0.0
    %141 = vmatprep.subr.mxu0 0.0
    %142 = vmatpush1.xpose.msra.mxu0 0.0
    %143 = vmatprep.subr.mxu0 0.0
    %144 = vmatpush1.xpose.msra.mxu0 0.0
    %145 = vmatprep.subr.mxu0 0.0
    %146 = vmatpush1.xpose.msra.mxu0 0.0
    %147 = vmatprep.subr.mxu0 0.0
    %148 = vmatpush1.xpose.msra.mxu0 0.0
    %149 = vmatprep.subr.mxu0 0.0
    %150 = vmatpush1.xpose.msra.mxu0 0.0
    %151 = vmatprep.subr.mxu0 0.0
    %152 = vmatpush1.xpose.msra.mxu0 0.0
    %153 = vmatprep.subr.mxu0 0.0
    %154 = vmatpush1.xpose.msra.mxu0 0.0
    %155 = vmatprep.mubr.f32.mxu0 0.0
    %156 = vmatmul.mubr.f32.gmra.mrb[0].mxu0 %v41
    %v157 = vpop.f32.mrb[0].mxu0
    %v158 = vadd.f32 %v37, %v157
    %v159 = vpop.f32.mrb[0].mxu0
    %160 = vdwg.mxu0
    %161 = vst [vmem:[#allocation2] sm:$0xff] %v158
    // Predicated region
    $region14: #{selector_get_logits.1} parent=1 // pred_check
      _
    $region15: #{selector_get_logits.1} parent=1 // pred_check_branch
      %163 = sbr.rel (0) target = $region17
    $region16: #{selector_get_logits.1} parent=1 // pred_region
      %s165 = ssub.s32 128, 128
      %166 = vsyncadd [#allocation3], %s165
      %s168 = sshll.u32 [#allocation2], 4
      %s169 = int_to_ptr.vmem [resolvable:$true] %s168
      %171 = dma.vmem_to_hbm [thread:$0]  %s169, 128, %s3, [#allocation3]
    $region17: #{selector_get_logits.1} parent=1 // pred_fallthru
      _
    // Predicated region
    $region18: #{selector_get_logits.1} parent=1 // pred_check
      _
    $region19: #{selector_get_logits.1} parent=1 // pred_check_branch
      %173 = sbr.rel (0) target = $region21
    $region20: #{selector_get_logits.1} parent=1 // pred_region
      %174 = dma.done [#allocation3], 128
    $region21: #{selector_get_logits.1} parent=1 // pred_fallthru
      _
    %175 = vsyncpa [#allocation3], 1

</llo_original>
